<compile_context>
chip_gen: v7x
topology: tpu7x:2x2x1
jax: 0.10.0
libtpu: 0.0.40
codegen_flags: <defaults>
</compile_context>

<pallas_src>
import math

import jax
import jax.numpy as jnp
from jax.experimental import pallas as pl
from jax.experimental.pallas import tpu as pltpu


def _attn_kernel(x_ref, wqkv_ref, wo_ref, o_ref):
    bt, s, dp = x_ref.shape
    x2 = x_ref[...].reshape(bt * s, dp)              # fold batch into MXU rows

    # Fused Q/K/V projection: one (bt*s, dp) @ (dp, 3*dp) MXU matmul.
    qkv = jnp.dot(x2, wqkv_ref[...], preferred_element_type=jnp.float32)
    q = qkv[:, :dp].reshape(bt, s, dp)               # 1/sqrt(D) already folded in
    k = qkv[:, dp:2 * dp].reshape(bt, s, dp)
    v = qkv[:, 2 * dp:].reshape(bt, s, dp)

    # scores = q @ k^T via contraction of the last dims (no explicit transpose).
    scores = jnp.einsum("bqd,bkd->bqk", q, k,
                        preferred_element_type=jnp.float32)

    # Numerically stable softmax; reciprocal goes to the EUP (approx vrcp).
    m = jnp.max(scores, axis=-1, keepdims=True)
    e = jnp.exp(scores - m)
    attn = e * pl.reciprocal(jnp.sum(e, axis=-1, keepdims=True), approx=True)

    out = jnp.einsum("bqk,bkd->bqd", attn, v,
                     preferred_element_type=jnp.float32)

    # Output projection, again with batch folded into rows.
    y = jnp.dot(out.reshape(bt * s, dp), wo_ref[...],
                preferred_element_type=jnp.float32)
    o_ref[...] = y.reshape(bt, s, dp).astype(o_ref.dtype)


def _round_up(x, m):
    return (x + m - 1) // m * m


def _pick_batch_tile(B, S, Dp):
    """Batch tile: aim for >=256 MXU rows per projection matmul, stay VMEM
    bounded, and divide B so no partial blocks are needed."""
    bt = min(B, max(1, -(-256 // S)))
    # generous f32 per-batch working-set estimate (x, qkv, q/k/v, out, y, scores...)
    per_b = (S * Dp * 10 + S * S * 4) * 4
    budget = 20 * 1024 * 1024           # headroom under v7x's 32 MiB scoped VMEM
    while bt > 1 and bt * per_b > budget:
        bt -= 1
    while B % bt:
        bt -= 1
    return bt


def shai_multihead_attention(x, wq, wk, wv, wo):
    """x: (B, S, D) float32; w*: (D, D) in PyTorch (out, in) convention."""
    B, S, D = x.shape
    Dp = _round_up(max(D, 128), 128)     # lane-dense feature dim

    # Fold the 1/sqrt(D) score scale into Wq; pre-transpose so kernel does x @ W^T.
    scale = 1.0 / math.sqrt(D)
    wq_t = (wq * scale).T
    wk_t, wv_t, wo_t = wk.T, wv.T, wo.T

    def pad2(w):
        return jnp.pad(w, ((0, Dp - D), (0, Dp - D))) if Dp != D else w

    w_qkv = jnp.concatenate([pad2(wq_t), pad2(wk_t), pad2(wv_t)], axis=1)  # (Dp, 3Dp)
    w_o = pad2(wo_t)                                                       # (Dp, Dp)
    x_p = jnp.pad(x, ((0, 0), (0, 0), (0, Dp - D))) if Dp != D else x      # (B, S, Dp)

    bt = _pick_batch_tile(B, S, Dp)
    grid = (B // bt,)
    # Note (v7x): if B/bt == 1 one TensorCore idles; at these shapes the
    # row-batching win dominates, so we keep the larger tile.

    # Explicit scoped-VMEM budget: double-buffered x/out blocks + resident
    # weights + in-kernel intermediates (+ slack), clamped to [16, 48] MiB.
    blk = bt * S * Dp * 4
    wbytes = (Dp * 3 * Dp + Dp * Dp) * 4
    interm = bt * (S * Dp * 10 + S * S * 4) * 4
    vmem_limit = int(min(max(4 * blk + 2 * wbytes + interm + (4 << 20), 16 << 20),
                         48 << 20))

    grid_spec = pltpu.PrefetchScalarGridSpec(
        num_scalar_prefetch=0,
        grid=grid,
        in_specs=[
            pl.BlockSpec((bt, S, Dp), lambda i: (i, 0, 0)),   # x batch tile
            pl.BlockSpec((Dp, 3 * Dp), lambda i: (0, 0)),     # fused Wqkv^T (resident)
            pl.BlockSpec((Dp, Dp), lambda i: (0, 0)),         # Wo^T (resident)
        ],
        out_specs=pl.BlockSpec((bt, S, Dp), lambda i: (i, 0, 0)),
    )

    y_p = pl.pallas_call(
        _attn_kernel,
        out_shape=jax.ShapeDtypeStruct((B, S, Dp), x.dtype),
        grid_spec=grid_spec,
        compiler_params=pltpu.CompilerParams(
            dimension_semantics=("parallel",),
            vmem_limit_bytes=vmem_limit,
        ),
    )(x_p, w_qkv, w_o)

    return y_p[..., :D] if Dp != D else y_p


def _reference(x, wq, wk, wv, wo):
    q = x @ wq.T
    k = x @ wk.T
    v = x @ wv.T
    scores = jnp.einsum("bqd,bkd->bqk", q, k) / math.sqrt(x.shape[-1])
    attn = jax.nn.softmax(scores, axis=-1)
    out = jnp.einsum("bqk,bkd->bqd", attn, v)
    return out @ wo.T


if __name__ == "__main__":
    B, S, D = 2, 8, 32
    key = jax.random.PRNGKey(0)
    kx, kq, kk, kv, ko = jax.random.split(key, 5)

    x = jax.random.normal(kx, (B, S, D), dtype=jnp.float32)
    # Deterministic "Kaiming-uniform-like" init for the 4 Linear weights (out, in)
    bound = 1.0 / math.sqrt(D)
    wq = jax.random.uniform(kq, (D, D), jnp.float32, -bound, bound)
    wk = jax.random.uniform(kk, (D, D), jnp.float32, -bound, bound)
    wv = jax.random.uniform(kv, (D, D), jnp.float32, -bound, bound)
    wo = jax.random.uniform(ko, (D, D), jnp.float32, -bound, bound)

    y = shai_multihead_attention(x, wq, wk, wv, wo)
    y = jax.block_until_ready(y)

    y_ref = _reference(x, wq, wk, wv, wo)
    assert y.shape == (B, S, D)
    # approx=True softmax reciprocal (EUP vrcp) contributes a small (~1e-4 level)
    # relative error in the normalization; everything else tracks the f32 reference.
    assert jnp.allclose(y, y_ref, atol=5e-3, rtol=5e-3), "mismatch vs reference"

    print("KERNEL_OK")
</pallas_src>

<mosaic_0001>
module attributes {stable_mosaic.version = 11 : i64} {
  func.func @_attn_kernel(%arg0: i32, %arg1: memref<2x8x128xf32, #tpu.memory_space<vmem>>, %arg2: memref<128x384xf32, #tpu.memory_space<vmem>>, %arg3: memref<128x128xf32, #tpu.memory_space<vmem>>, %arg4: memref<2x8x128xf32, #tpu.memory_space<vmem>>) attributes {dimension_semantics = [#tpu.dimension_semantics<parallel>], iteration_bounds = array<i64: 1>, scalar_prefetch = 0 : i64, scratch_operands = 0 : i64, tpu.core_type = #tpu.core_type<tc>, window_params = [{transform_indices = @transform_0, window_bounds = array<i64: 2, 8, 128>}, {pipeline_mode = #tpu.pipeline_mode<synchronous>, transform_indices = @transform_1, window_bounds = array<i64: 128, 384>}, {pipeline_mode = #tpu.pipeline_mode<synchronous>, transform_indices = @transform_2, window_bounds = array<i64: 128, 128>}, {transform_indices = @transform_3, window_bounds = array<i64: 2, 8, 128>}]} {
    %c0 = arith.constant 0 : index
    %c0_0 = arith.constant 0 : index
    %c0_1 = arith.constant 0 : index
    %0 = vector.load %arg1[%c0, %c0_0, %c0_1] : memref<2x8x128xf32, #tpu.memory_space<vmem>>, vector<2x8x128xf32>
    %1 = vector.shape_cast %0 : vector<2x8x128xf32> to vector<16x128xf32>
    %c0_2 = arith.constant 0 : index
    %c0_3 = arith.constant 0 : index
    %2 = vector.load %arg2[%c0_2, %c0_3] : memref<128x384xf32, #tpu.memory_space<vmem>>, vector<128x384xf32>
    %cst = arith.constant dense<0.000000e+00> : vector<16x384xf32>
    %3 = tpu.matmul %1, %2, %cst {dimension_numbers = #tpu.dot_dimension_numbers<[1], [0], [0], [1], [0, 0, 1, 1], [], []>} : vector<16x128xf32>, vector<128x384xf32>, vector<16x384xf32> -> vector<16x384xf32>
    %4 = vector.extract_strided_slice %3 {offsets = [0, 0], sizes = [16, 128], strides = [1, 1]} : vector<16x384xf32> to vector<16x128xf32>
    %5 = vector.shape_cast %4 : vector<16x128xf32> to vector<2x8x128xf32>
    %6 = vector.extract_strided_slice %3 {offsets = [0, 128], sizes = [16, 128], strides = [1, 1]} : vector<16x384xf32> to vector<16x128xf32>
    %7 = vector.shape_cast %6 : vector<16x128xf32> to vector<2x8x128xf32>
    %8 = vector.extract_strided_slice %3 {offsets = [0, 256], sizes = [16, 128], strides = [1, 1]} : vector<16x384xf32> to vector<16x128xf32>
    %9 = vector.shape_cast %8 : vector<16x128xf32> to vector<2x8x128xf32>
    "tpu.trace_start"() <{level = 10 : i32, message = "bqd,bkd->bqk"}> : () -> ()
    %cst_4 = arith.constant dense<0.000000e+00> : vector<2x8x8xf32>
    %10 = tpu.matmul %5, %7, %cst_4 {dimension_numbers = #tpu.dot_dimension_numbers<[2], [2], [1], [1], [0, 0, 0, 1, 1, 1], [0], [0]>} : vector<2x8x128xf32>, vector<2x8x128xf32>, vector<2x8x8xf32> -> vector<2x8x8xf32>
    "tpu.trace_stop"() : () -> ()
    %cst_5 = arith.constant dense<0xFF800000> : vector<2x8xf32>
    %11 = vector.multi_reduction <maximumf>, %10, %cst_5 [2] : vector<2x8x8xf32> to vector<2x8xf32>
    %12 = vector.shape_cast %11 : vector<2x8xf32> to vector<2x8x1xf32>
    %13 = vector.broadcast %12 : vector<2x8x1xf32> to vector<2x8x8xf32>
    %14 = arith.subf %10, %13 : vector<2x8x8xf32>
    %15 = math.exp %14 : vector<2x8x8xf32>
    %cst_6 = arith.constant dense<0.000000e+00> : vector<2x8xf32>
    %16 = vector.multi_reduction <add>, %15, %cst_6 [2] : vector<2x8x8xf32> to vector<2x8xf32>
    %17 = vector.shape_cast %16 : vector<2x8xf32> to vector<2x8x1xf32>
    %18 = tpu.reciprocal %17 {approx = true} : vector<2x8x1xf32> -> vector<2x8x1xf32>
    %19 = vector.broadcast %18 : vector<2x8x1xf32> to vector<2x8x8xf32>
    %20 = arith.mulf %15, %19 : vector<2x8x8xf32>
    "tpu.trace_start"() <{level = 10 : i32, message = "bqk,bkd->bqd"}> : () -> ()
    %cst_7 = arith.constant dense<0.000000e+00> : vector<2x8x128xf32>
    %21 = tpu.matmul %20, %9, %cst_7 {dimension_numbers = #tpu.dot_dimension_numbers<[2], [1], [1], [2], [0, 0, 0, 1, 1, 2], [0], [0]>} : vector<2x8x8xf32>, vector<2x8x128xf32>, vector<2x8x128xf32> -> vector<2x8x128xf32>
    "tpu.trace_stop"() : () -> ()
    %22 = vector.shape_cast %21 : vector<2x8x128xf32> to vector<16x128xf32>
    %c0_8 = arith.constant 0 : index
    %c0_9 = arith.constant 0 : index
    %23 = vector.load %arg3[%c0_8, %c0_9] : memref<128x128xf32, #tpu.memory_space<vmem>>, vector<128x128xf32>
    %cst_10 = arith.constant dense<0.000000e+00> : vector<16x128xf32>
    %24 = tpu.matmul %22, %23, %cst_10 {dimension_numbers = #tpu.dot_dimension_numbers<[1], [0], [0], [1], [0, 0, 1, 1], [], []>} : vector<16x128xf32>, vector<128x128xf32>, vector<16x128xf32> -> vector<16x128xf32>
    %25 = vector.shape_cast %24 : vector<16x128xf32> to vector<2x8x128xf32>
    %c0_11 = arith.constant 0 : index
    %c0_12 = arith.constant 0 : index
    %c0_13 = arith.constant 0 : index
    %26 = vector.load %arg4[%c0_11, %c0_12, %c0_13] : memref<2x8x128xf32, #tpu.memory_space<vmem>>, vector<2x8x128xf32>
    tpu.vector_store %arg4[%c0_11, %c0_12, %c0_13], %25 {strides = array<i32>} : memref<2x8x128xf32, #tpu.memory_space<vmem>>, vector<2x8x128xf32>,
    return
  }
  func.func @transform_0(%arg0: i32) -> (i32, i32, i32) {
    %c0_i32 = arith.constant 0 : i32
    %c0_i32_0 = arith.constant 0 : i32
    %c0_i32_1 = arith.constant 0 : i32
    return %arg0, %c0_i32, %c0_i32_0 : i32, i32, i32
  }
  func.func @transform_1(%arg0: i32) -> (i32, i32) {
    %c0_i32 = arith.constant 0 : i32
    %c0_i32_0 = arith.constant 0 : i32
    %c0_i32_1 = arith.constant 0 : i32
    return %c0_i32, %c0_i32_0 : i32, i32
  }
  func.func @transform_2(%arg0: i32) -> (i32, i32) {
    %c0_i32 = arith.constant 0 : i32
    %c0_i32_0 = arith.constant 0 : i32
    %c0_i32_1 = arith.constant 0 : i32
    return %c0_i32, %c0_i32_0 : i32, i32
  }
  func.func @transform_3(%arg0: i32) -> (i32, i32, i32) {
    %c0_i32 = arith.constant 0 : i32
    %c0_i32_0 = arith.constant 0 : i32
    %c0_i32_1 = arith.constant 0 : i32
    return %arg0, %c0_i32, %c0_i32_0 : i32, i32, i32
  }
}

</mosaic_0001>

<llo_original>
// kernel: tpu_custom_call.1
$region0: #{tpu_custom_call.1}
  #allocation0 [shape = 'u32[]', space=smem, size = 0x4, offset = 0x4, fixed_abs, tag = 'smem constant byte address 0x4 - core index']
  #allocation1 [shape = 'u32[144,128]{1,0:T(1,128)}', space=vmem, size = 0x12000, scoped, tag = 'internal scratch']
  %s0 = inlined_call_operand.hbm [shape: f32[2,8,128], index: 0, kind: input, shape index: {}]
  %s1 = inlined_call_operand.hbm [shape: f32[128,384], index: 1, kind: input, shape index: {}]
  %s2 = inlined_call_operand.hbm [shape: f32[128,128], index: 2, kind: input, shape index: {}]
  %s3 = inlined_call_operand.hbm [shape: f32[2,8,128], index: 3, kind: output, shape index: {}]
  %s4 = sld [smem:[#allocation0]]
  $region34: #{tpu_custom_call.1} parent=0
    _
  %s6 = ssub.s32 1, %s4
  %s7 = scalar_select 0, %s6, %s4
  $region1: #{tpu_custom_call.1} parent=0
    #allocation2 [shape = 'u8[8192]{0}', space=vmem, size = 0x2000, scoped, tag = 'input window, operand 0, single buffered']
    #allocation3 [shape = 's32[1]{0}', space=sflag, size = 0x4, scoped, tag = 'scoped memory for tpu_custom_call.1']
    #allocation4 [shape = 's32[1]{0}', space=sflag, size = 0x4, scoped, tag = 'scoped memory for tpu_custom_call.1']
    #allocation5 [shape = 'u8[196608]{0}', space=vmem, size = 0x30000, scoped, tag = 'input window, operand 1, single buffered']
    #allocation6 [shape = 's32[1]{0}', space=sflag, size = 0x4, scoped, tag = 'scoped memory for tpu_custom_call.1']
    #allocation7 [shape = 'u8[65536]{0}', space=vmem, size = 0x10000, scoped, tag = 'input window, operand 2, single buffered']
    #allocation8 [shape = 'u8[8192]{0}', space=vmem, size = 0x2000, scoped, tag = 'output window, operand 0, single buffered']
    %8 = vsyncpa [#allocation3], 0
    %9 = vsyncpa [#allocation6], 0
    %10 = vsyncpa [#allocation4], 0
    // Predicated region
    $region2: #{tpu_custom_call.1} parent=1 // pred_check
      _
    $region3: #{tpu_custom_call.1} parent=1 // pred_check_branch
      %12 = sbr.rel (0) target = $region5
    $region4: #{tpu_custom_call.1} parent=1 // pred_region
      %s14 = ssub.s32 256, 256
      %15 = vsyncadd [#allocation3], %s14
      %s16 = sshll.u32 [#allocation2], 4
      %s17 = int_to_ptr.vmem [resolvable:$true] %s16
      %22 = dma.hbm_to_vmem [thread:$0]  %s0, 256, %s17, [#allocation3], 128, 128, 8
    $region5: #{tpu_custom_call.1} parent=1 // pred_fallthru
      _
    // Predicated region
    $region6: #{tpu_custom_call.1} parent=1 // pred_check
      _
    $region7: #{tpu_custom_call.1} parent=1 // pred_check_branch
      %24 = sbr.rel (0) target = $region9
    $region8: #{tpu_custom_call.1} parent=1 // pred_region
      %s26 = ssub.s32 6144, 6144
      %27 = vsyncadd [#allocation6], %s26
      %s28 = sshll.u32 [#allocation5], 4
      %s29 = int_to_ptr.vmem [resolvable:$true] %s28
      %34 = dma.hbm_to_vmem [thread:$0]  %s1, 6144, %s29, [#allocation6], 384, 384, 24
    $region9: #{tpu_custom_call.1} parent=1 // pred_fallthru
      _
    // Predicated region
    $region10: #{tpu_custom_call.1} parent=1 // pred_check
      _
    $region11: #{tpu_custom_call.1} parent=1 // pred_check_branch
      %36 = sbr.rel (0) target = $region13
    $region12: #{tpu_custom_call.1} parent=1 // pred_region
      %s38 = ssub.s32 2048, 2048
      %39 = vsyncadd [#allocation6], %s38
      %s40 = sshll.u32 [#allocation7], 4
      %s41 = int_to_ptr.vmem [resolvable:$true] %s40
      %46 = dma.hbm_to_vmem [thread:$0]  %s2, 2048, %s41, [#allocation6], 128, 128, 8
    $region13: #{tpu_custom_call.1} parent=1 // pred_fallthru
      _
    // Predicated region
    $region14: #{tpu_custom_call.1} parent=1 // pred_check
      _
    $region15: #{tpu_custom_call.1} parent=1 // pred_check_branch
      %48 = sbr.rel (0) target = $region17
    $region16: #{tpu_custom_call.1} parent=1 // pred_region
      %49 = dma.done [#allocation3], 256
    $region17: #{tpu_custom_call.1} parent=1 // pred_fallthru
      _
    // Predicated region
    $region18: #{tpu_custom_call.1} parent=1 // pred_check
      _
    $region19: #{tpu_custom_call.1} parent=1 // pred_check_branch
      %51 = sbr.rel (0) target = $region21
    $region20: #{tpu_custom_call.1} parent=1 // pred_region
      %52 = dma.done [#allocation6], 6144
    $region21: #{tpu_custom_call.1} parent=1 // pred_fallthru
      _
    // Predicated region
    $region22: #{tpu_custom_call.1} parent=1 // pred_check
      _
    $region23: #{tpu_custom_call.1} parent=1 // pred_check_branch
      %54 = sbr.rel (0) target = $region25
    $region24: #{tpu_custom_call.1} parent=1 // pred_region
      %55 = dma.done [#allocation6], 2048
    $region25: #{tpu_custom_call.1} parent=1 // pred_fallthru
      _
    %v56 = vld [vmem:[#allocation2] sm:$0xff]
    %v57 = vld [vmem:[#allocation2 + $0x8] sm:$0xff]
    %v58 = vld [vmem:[#allocation5] sm:$0xff]
    %v59 = vld [vmem:[#allocation5 + $0x8] sm:$0xff]
    %v60 = vld [vmem:[#allocation5 + $0x10] sm:$0xff]
    %v61 = vld [vmem:[#allocation5 + $0x18] sm:$0xff]
    %v62 = vld [vmem:[#allocation5 + $0x20] sm:$0xff]
    %v63 = vld [vmem:[#allocation5 + $0x28] sm:$0xff]
    %v64 = vld [vmem:[#allocation5 + $0x30] sm:$0xff]
    %v65 = vld [vmem:[#allocation5 + $0x38] sm:$0xff]
    %v66 = vld [vmem:[#allocation5 + $0x40] sm:$0xff]
    %v67 = vld [vmem:[#allocation5 + $0x48] sm:$0xff]
    %v68 = vld [vmem:[#allocation5 + $0x50] sm:$0xff]
    %v69 = vld [vmem:[#allocation5 + $0x58] sm:$0xff]
    %v70 = vld [vmem:[#allocation5 + $0x60] sm:$0xff]
    %v71 = vld [vmem:[#allocation5 + $0x68] sm:$0xff]
    %v72 = vld [vmem:[#allocation5 + $0x70] sm:$0xff]
    %v73 = vld [vmem:[#allocation5 + $0x78] sm:$0xff]
    %v74 = vld [vmem:[#allocation5 + $0x80] sm:$0xff]
    %v75 = vld [vmem:[#allocation5 + $0x88] sm:$0xff]
    %v76 = vld [vmem:[#allocation5 + $0x90] sm:$0xff]
    %v77 = vld [vmem:[#allocation5 + $0x98] sm:$0xff]
    %v78 = vld [vmem:[#allocation5 + $0xa0] sm:$0xff]
    %v79 = vld [vmem:[#allocation5 + $0xa8] sm:$0xff]
    %v80 = vld [vmem:[#allocation5 + $0xb0] sm:$0xff]
    %v81 = vld [vmem:[#allocation5 + $0xb8] sm:$0xff]
    %v82 = vld [vmem:[#allocation5 + $0xc0] sm:$0xff]
    %v83 = vld [vmem:[#allocation5 + $0xc8] sm:$0xff]
    %v84 = vld [vmem:[#allocation5 + $0xd0] sm:$0xff]
    %v85 = vld [vmem:[#allocation5 + $0xd8] sm:$0xff]
    %v86 = vld [vmem:[#allocation5 + $0xe0] sm:$0xff]
    %v87 = vld [vmem:[#allocation5 + $0xe8] sm:$0xff]
    %v88 = vld [vmem:[#allocation5 + $0xf0] sm:$0xff]
    %v89 = vld [vmem:[#allocation5 + $0xf8] sm:$0xff]
    %v90 = vld [vmem:[#allocation5 + $0x100] sm:$0xff]
    %v91 = vld [vmem:[#allocation5 + $0x108] sm:$0xff]
    %v92 = vld [vmem:[#allocation5 + $0x110] sm:$0xff]
    %v93 = vld [vmem:[#allocation5 + $0x118] sm:$0xff]
    %v94 = vld [vmem:[#allocation5 + $0x120] sm:$0xff]
    %v95 = vld [vmem:[#allocation5 + $0x128] sm:$0xff]
    %v96 = vld [vmem:[#allocation5 + $0x130] sm:$0xff]
    %v97 = vld [vmem:[#allocation5 + $0x138] sm:$0xff]
    %v98 = vld [vmem:[#allocation5 + $0x140] sm:$0xff]
    %v99 = vld [vmem:[#allocation5 + $0x148] sm:$0xff]
    %v100 = vld [vmem:[#allocation5 + $0x150] sm:$0xff]
    %v101 = vld [vmem:[#allocation5 + $0x158] sm:$0xff]
    %v102 = vld [vmem:[#allocation5 + $0x160] sm:$0xff]
    %v103 = vld [vmem:[#allocation5 + $0x168] sm:$0xff]
    %v104 = vld [vmem:[#allocation5 + $0x170] sm:$0xff]
    %v105 = vld [vmem:[#allocation5 + $0x178] sm:$0xff]
    %106 = vmatprep.subr.mxu0 %v59
    %107 = vmatpush1.msra.mxu0 %v58
    %108 = vmatprep.subr.mxu0 %v62
    %109 = vmatpush1.msra.mxu0 %v61
    %110 = vmatprep.subr.mxu0 %v65
    %111 = vmatpush1.msra.mxu0 %v64
    %112 = vmatprep.subr.mxu0 %v68
    %113 = vmatpush1.msra.mxu0 %v67
    %114 = vmatprep.subr.mxu0 %v71
    %115 = vmatpush1.msra.mxu0 %v70
    %116 = vmatprep.subr.mxu0 %v74
    %117 = vmatpush1.msra.mxu0 %v73
    %118 = vmatprep.subr.mxu0 %v77
    %119 = vmatpush1.msra.mxu0 %v76
    %120 = vmatprep.subr.mxu0 %v80
    %121 = vmatpush1.msra.mxu0 %v79
    %122 = vmatprep.subr.mxu0 %v83
    %123 = vmatpush1.msra.mxu0 %v82
    %124 = vmatprep.subr.mxu0 %v86
    %125 = vmatpush1.msra.mxu0 %v85
    %126 = vmatprep.subr.mxu0 %v89
    %127 = vmatpush1.msra.mxu0 %v88
    %128 = vmatprep.subr.mxu0 %v92
    %129 = vmatpush1.msra.mxu0 %v91
    %130 = vmatprep.subr.mxu0 %v95
    %131 = vmatpush1.msra.mxu0 %v94
    %132 = vmatprep.subr.mxu0 %v98
    %133 = vmatpush1.msra.mxu0 %v97
    %134 = vmatprep.subr.mxu0 %v101
    %135 = vmatpush1.msra.mxu0 %v100
    %136 = vmatprep.subr.mxu0 %v104
    %137 = vmatpush1.msra.mxu0 %v103
    %138 = vmatprep.subr.mxu0 0.0
    %139 = vmatpush1.msra.mxu0 0.0
    %140 = vmatprep.subr.mxu0 0.0
    %141 = vmatpush1.msra.mxu0 0.0
    %142 = vmatprep.subr.mxu0 0.0
    %143 = vmatpush1.msra.mxu0 0.0
    %144 = vmatprep.subr.mxu0 0.0
    %145 = vmatpush1.msra.mxu0 0.0
    %146 = vmatprep.subr.mxu0 0.0
    %147 = vmatpush1.msra.mxu0 0.0
    %148 = vmatprep.subr.mxu0 0.0
    %149 = vmatpush1.msra.mxu0 0.0
    %150 = vmatprep.subr.mxu0 0.0
    %151 = vmatpush1.msra.mxu0 0.0
    %152 = vmatprep.subr.mxu0 0.0
    %153 = vmatpush1.msra.mxu0 0.0
    %154 = vmatprep.subr.mxu0 0.0
    %155 = vmatpush1.msra.mxu0 0.0
    %156 = vmatprep.subr.mxu0 0.0
    %157 = vmatpush1.msra.mxu0 0.0
    %158 = vmatprep.subr.mxu0 0.0
    %159 = vmatpush1.msra.mxu0 0.0
    %160 = vmatprep.subr.mxu0 0.0
    %161 = vmatpush1.msra.mxu0 0.0
    %162 = vmatprep.subr.mxu0 0.0
    %163 = vmatpush1.msra.mxu0 0.0
    %164 = vmatprep.subr.mxu0 0.0
    %165 = vmatpush1.msra.mxu0 0.0
    %166 = vmatprep.subr.mxu0 0.0
    %167 = vmatpush1.msra.mxu0 0.0
    %168 = vmatprep.subr.mxu0 0.0
    %169 = vmatpush1.msra.mxu0 0.0
    %170 = vmatprep.mubr.f32.mxu0 0.0
    %171 = vmatmul.mubr.f32.gmra.mrb[0].mxu0 %v56
    %v172 = vpop.f32.mrb[0].mxu0
    %v173 = vadd.f32 0.0, %v172
    %v174 = vpop.f32.mrb[0].mxu0
    %v175 = vadd.f32 0.0, %v174
    %176 = vmatprep.mubr.f32.mxu0 0.0
    %177 = vmatmul.mubr.f32.gmra.mrb[0].mxu0 %v57
    %v178 = vpop.f32.mrb[0].mxu0
    %v179 = vadd.f32 0.0, %v178
    %v180 = vpop.f32.mrb[0].mxu0
    %v181 = vadd.f32 0.0, %v180
    %182 = vdwg.mxu0
    %183 = vmatprep.subr.mxu0 0.0
    %184 = vmatpush1.msra.mxu0 %v60
    %185 = vmatprep.subr.mxu0 0.0
    %186 = vmatpush1.msra.mxu0 %v63
    %187 = vmatprep.subr.mxu0 0.0
    %188 = vmatpush1.msra.mxu0 %v66
    %189 = vmatprep.subr.mxu0 0.0
    %190 = vmatpush1.msra.mxu0 %v69
    %191 = vmatprep.subr.mxu0 0.0
    %192 = vmatpush1.msra.mxu0 %v72
    %193 = vmatprep.subr.mxu0 0.0
    %194 = vmatpush1.msra.mxu0 %v75
    %195 = vmatprep.subr.mxu0 0.0
    %196 = vmatpush1.msra.mxu0 %v78
    %197 = vmatprep.subr.mxu0 0.0
    %198 = vmatpush1.msra.mxu0 %v81
    %199 = vmatprep.subr.mxu0 0.0
    %200 = vmatpush1.msra.mxu0 %v84
    %201 = vmatprep.subr.mxu0 0.0
    %202 = vmatpush1.msra.mxu0 %v87
    %203 = vmatprep.subr.mxu0 0.0
    %204 = vmatpush1.msra.mxu0 %v90
    %205 = vmatprep.subr.mxu0 0.0
    %206 = vmatpush1.msra.mxu0 %v93
    %207 = vmatprep.subr.mxu0 0.0
    %208 = vmatpush1.msra.mxu0 %v96
    %209 = vmatprep.subr.mxu0 0.0
    %210 = vmatpush1.msra.mxu0 %v99
    %211 = vmatprep.subr.mxu0 0.0
    %212 = vmatpush1.msra.mxu0 %v102
    %213 = vmatprep.subr.mxu0 0.0
    %214 = vmatpush1.msra.mxu0 %v105
    %215 = vmatprep.subr.mxu0 0.0
    %216 = vmatpush1.msra.mxu0 0.0
    %217 = vmatprep.subr.mxu0 0.0
    %218 = vmatpush1.msra.mxu0 0.0
    %219 = vmatprep.subr.mxu0 0.0
    %220 = vmatpush1.msra.mxu0 0.0
    %221 = vmatprep.subr.mxu0 0.0
    %222 = vmatpush1.msra.mxu0 0.0
    %223 = vmatprep.subr.mxu0 0.0
    %224 = vmatpush1.msra.mxu0 0.0
    %225 = vmatprep.subr.mxu0 0.0
    %226 = vmatpush1.msra.mxu0 0.0
    %227 = vmatprep.subr.mxu0 0.0
    %228 = vmatpush1.msra.mxu0 0.0
    %229 = vmatprep.subr.mxu0 0.0
    %230 = vmatpush1.msra.mxu0 0.0
    %231 = vmatprep.subr.mxu0 0.0
    %232 = vmatpush1.msra.mxu0 0.0
    %233 = vmatprep.subr.mxu0 0.0
    %234 = vmatpush1.msra.mxu0 0.0
    %235 = vmatprep.subr.mxu0 0.0
    %236 = vmatpush1.msra.mxu0 0.0
    %237 = vmatprep.subr.mxu0 0.0
    %238 = vmatpush1.msra.mxu0 0.0
    %239 = vmatprep.subr.mxu0 0.0
    %240 = vmatpush1.msra.mxu0 0.0
    %241 = vmatprep.subr.mxu0 0.0
    %242 = vmatpush1.msra.mxu0 0.0
    %243 = vmatprep.subr.mxu0 0.0
    %244 = vmatpush1.msra.mxu0 0.0
    %245 = vmatprep.subr.mxu0 0.0
    %246 = vmatpush1.msra.mxu0 0.0
    %247 = vmatprep.mubr.f32.mxu0 0.0
    %248 = vmatmul.mubr.f32.gmra.mrb[0].mxu0 %v56
    %v249 = vpop.f32.mrb[0].mxu0
    %v250 = vadd.f32 0.0, %v249
    %v251 = vpop.f32.mrb[0].mxu0
    %252 = vmatprep.mubr.f32.mxu0 0.0
    %253 = vmatmul.mubr.f32.gmra.mrb[0].mxu0 %v57
    %v254 = vpop.f32.mrb[0].mxu0
    %v255 = vadd.f32 0.0, %v254
    %v256 = vpop.f32.mrb[0].mxu0
    %257 = vdwg.mxu0
    %258 = vmatprep.subr.mxu0 0.0
    %259 = vmatpush1.xpose.msra.mxu0 %v175
    %260 = vmatprep.subr.mxu0 0.0
    %261 = vmatpush1.xpose.msra.mxu0 0.0
    %262 = vmatprep.subr.mxu0 0.0
    %263 = vmatpush1.xpose.msra.mxu0 0.0
    %264 = vmatprep.subr.mxu0 0.0
    %265 = vmatpush1.xpose.msra.mxu0 0.0
    %266 = vmatprep.subr.mxu0 0.0
    %267 = vmatpush1.xpose.msra.mxu0 0.0
    %268 = vmatprep.subr.mxu0 0.0
    %269 = vmatpush1.xpose.msra.mxu0 0.0
    %270 = vmatprep.subr.mxu0 0.0
    %271 = vmatpush1.xpose.msra.mxu0 0.0
    %272 = vmatprep.subr.mxu0 0.0
    %273 = vmatpush1.xpose.msra.mxu0 0.0
    %274 = vmatprep.subr.mxu0 0.0
    %275 = vmatpush1.xpose.msra.mxu0 0.0
    %276 = vmatprep.subr.mxu0 0.0
    %277 = vmatpush1.xpose.msra.mxu0 0.0
    %278 = vmatprep.subr.mxu0 0.0
    %279 = vmatpush1.xpose.msra.mxu0 0.0
    %280 = vmatprep.subr.mxu0 0.0
    %281 = vmatpush1.xpose.msra.mxu0 0.0
    %282 = vmatprep.subr.mxu0 0.0
    %283 = vmatpush1.xpose.msra.mxu0 0.0
    %284 = vmatprep.subr.mxu0 0.0
    %285 = vmatpush1.xpose.msra.mxu0 0.0
    %286 = vmatprep.subr.mxu0 0.0
    %287 = vmatpush1.xpose.msra.mxu0 0.0
    %288 = vmatprep.subr.mxu0 0.0
    %289 = vmatpush1.xpose.msra.mxu0 0.0
    %290 = vmatprep.subr.mxu0 0.0
    %291 = vmatpush1.xpose.msra.mxu0 0.0
    %292 = vmatprep.subr.mxu0 0.0
    %293 = vmatpush1.xpose.msra.mxu0 0.0
    %294 = vmatprep.subr.mxu0 0.0
    %295 = vmatpush1.xpose.msra.mxu0 0.0
    %296 = vmatprep.subr.mxu0 0.0
    %297 = vmatpush1.xpose.msra.mxu0 0.0
    %298 = vmatprep.subr.mxu0 0.0
    %299 = vmatpush1.xpose.msra.mxu0 0.0
    %300 = vmatprep.subr.mxu0 0.0
    %301 = vmatpush1.xpose.msra.mxu0 0.0
    %302 = vmatprep.subr.mxu0 0.0
    %303 = vmatpush1.xpose.msra.mxu0 0.0
    %304 = vmatprep.subr.mxu0 0.0
    %305 = vmatpush1.xpose.msra.mxu0 0.0
    %306 = vmatprep.subr.mxu0 0.0
    %307 = vmatpush1.xpose.msra.mxu0 0.0
    %308 = vmatprep.subr.mxu0 0.0
    %309 = vmatpush1.xpose.msra.mxu0 0.0
    %310 = vmatprep.subr.mxu0 0.0
    %311 = vmatpush1.xpose.msra.mxu0 0.0
    %312 = vmatprep.subr.mxu0 0.0
    %313 = vmatpush1.xpose.msra.mxu0 0.0
    %314 = vmatprep.subr.mxu0 0.0
    %315 = vmatpush1.xpose.msra.mxu0 0.0
    %316 = vmatprep.subr.mxu0 0.0
    %317 = vmatpush1.xpose.msra.mxu0 0.0
    %318 = vmatprep.subr.mxu0 0.0
    %319 = vmatpush1.xpose.msra.mxu0 0.0
    %320 = vmatprep.subr.mxu0 0.0
    %321 = vmatpush1.xpose.msra.mxu0 0.0
    %322 = vmatprep.mubr.f32.mxu0 0.0
    %323 = vmatmul.mubr.f32.gmra.mrb[0].mxu0 %v173
    %v324 = vpop.f32.mrb[0].mxu0
    %v325 = vadd.f32 0.0, %v324
    %v326 = vpop.f32.mrb[0].mxu0
    %327 = vdwg.mxu0
    %328 = vmatprep.subr.mxu0 0.0
    %329 = vmatpush1.xpose.msra.mxu0 %v181
    %330 = vmatprep.subr.mxu0 0.0
    %331 = vmatpush1.xpose.msra.mxu0 0.0
    %332 = vmatprep.subr.mxu0 0.0
    %333 = vmatpush1.xpose.msra.mxu0 0.0
    %334 = vmatprep.subr.mxu0 0.0
    %335 = vmatpush1.xpose.msra.mxu0 0.0
    %336 = vmatprep.subr.mxu0 0.0
    %337 = vmatpush1.xpose.msra.mxu0 0.0
    %338 = vmatprep.subr.mxu0 0.0
    %339 = vmatpush1.xpose.msra.mxu0 0.0
    %340 = vmatprep.subr.mxu0 0.0
    %341 = vmatpush1.xpose.msra.mxu0 0.0
    %342 = vmatprep.subr.mxu0 0.0
    %343 = vmatpush1.xpose.msra.mxu0 0.0
    %344 = vmatprep.subr.mxu0 0.0
    %345 = vmatpush1.xpose.msra.mxu0 0.0
    %346 = vmatprep.subr.mxu0 0.0
    %347 = vmatpush1.xpose.msra.mxu0 0.0
    %348 = vmatprep.subr.mxu0 0.0
    %349 = vmatpush1.xpose.msra.mxu0 0.0
    %350 = vmatprep.subr.mxu0 0.0
    %351 = vmatpush1.xpose.msra.mxu0 0.0
    %352 = vmatprep.subr.mxu0 0.0
    %353 = vmatpush1.xpose.msra.mxu0 0.0
    %354 = vmatprep.subr.mxu0 0.0
    %355 = vmatpush1.xpose.msra.mxu0 0.0
    %356 = vmatprep.subr.mxu0 0.0
    %357 = vmatpush1.xpose.msra.mxu0 0.0
    %358 = vmatprep.subr.mxu0 0.0
    %359 = vmatpush1.xpose.msra.mxu0 0.0
    %360 = vmatprep.subr.mxu0 0.0
    %361 = vmatpush1.xpose.msra.mxu0 0.0
    %362 = vmatprep.subr.mxu0 0.0
    %363 = vmatpush1.xpose.msra.mxu0 0.0
    %364 = vmatprep.subr.mxu0 0.0
    %365 = vmatpush1.xpose.msra.mxu0 0.0
    %366 = vmatprep.subr.mxu0 0.0
    %367 = vmatpush1.xpose.msra.mxu0 0.0
    %368 = vmatprep.subr.mxu0 0.0
    %369 = vmatpush1.xpose.msra.mxu0 0.0
    %370 = vmatprep.subr.mxu0 0.0
    %371 = vmatpush1.xpose.msra.mxu0 0.0
    %372 = vmatprep.subr.mxu0 0.0
    %373 = vmatpush1.xpose.msra.mxu0 0.0
    %374 = vmatprep.subr.mxu0 0.0
    %375 = vmatpush1.xpose.msra.mxu0 0.0
    %376 = vmatprep.subr.mxu0 0.0
    %377 = vmatpush1.xpose.msra.mxu0 0.0
    %378 = vmatprep.subr.mxu0 0.0
    %379 = vmatpush1.xpose.msra.mxu0 0.0
    %380 = vmatprep.subr.mxu0 0.0
    %381 = vmatpush1.xpose.msra.mxu0 0.0
    %382 = vmatprep.subr.mxu0 0.0
    %383 = vmatpush1.xpose.msra.mxu0 0.0
    %384 = vmatprep.subr.mxu0 0.0
    %385 = vmatpush1.xpose.msra.mxu0 0.0
    %386 = vmatprep.subr.mxu0 0.0
    %387 = vmatpush1.xpose.msra.mxu0 0.0
    %388 = vmatprep.subr.mxu0 0.0
    %389 = vmatpush1.xpose.msra.mxu0 0.0
    %390 = vmatprep.subr.mxu0 0.0
    %391 = vmatpush1.xpose.msra.mxu0 0.0
    %392 = vmatprep.mubr.f32.mxu0 0.0
    %393 = vmatmul.mubr.f32.gmra.mrb[0].mxu0 %v179
    %v394 = vpop.f32.mrb[0].mxu0
    %v395 = vadd.f32 0.0, %v394
    %v396 = vpop.f32.mrb[0].mxu0
    %397 = vdwg.mxu0
    %vm398 = vcmask 64512
    %v399 = vsel %vm398, %v325, -inf
    %400 = vmax.xlane.f32.xlu0 %v399
    %v401 = vpop.xlane.xlu0 %400
    %v402 = vsel %vm398, %v395, -inf
    %403 = vmax.xlane.f32.xlu0 %v402
    %v404 = vpop.xlane.xlu0 %403
    %v405 = vsub.f32 %v325, %v401
    %v406 = vsub.f32 %v395, %v404
    %v407 = vmul.f32 %v405, 1.442695
    %v408 = vpow.pop %v407
    %v409 = vmul.f32 %v406, 1.442695
    %v410 = vpow.pop %v409
    %v411 = vsel %vm398, %v408, 0.0
    %412 = vadd.xlane.f32.xlu0 %v411
    %v413 = vpop.xlane.xlu0 %412
    %v414 = vsel %vm398, %v410, 0.0
    %415 = vadd.xlane.f32.xlu0 %v414
    %v416 = vpop.xlane.xlu0 %415
    %v417 = vrcp.pop %v413
    %v418 = vrcp.pop %v416
    %v419 = vmul.f32 %v408, %v417
    %v420 = vmul.f32 %v410, %v418
    %v422 = vsel %vm398, %v419, 0
    %424 = vmatprep.subr.mxu0 0.0
    %425 = vmatpush1.msra.mxu0 %v250
    %426 = vmatprep.subr.mxu0 0.0
    %427 = vmatpush1.msra.mxu0 0.0
    %428 = vmatprep.subr.mxu0 0.0
    %429 = vmatpush1.msra.mxu0 0.0
    %430 = vmatprep.subr.mxu0 0.0
    %431 = vmatpush1.msra.mxu0 0.0
    %432 = vmatprep.subr.mxu0 0.0
    %433 = vmatpush1.msra.mxu0 0.0
    %434 = vmatprep.subr.mxu0 0.0
    %435 = vmatpush1.msra.mxu0 0.0
    %436 = vmatprep.subr.mxu0 0.0
    %437 = vmatpush1.msra.mxu0 0.0
    %438 = vmatprep.subr.mxu0 0.0
    %439 = vmatpush1.msra.mxu0 0.0
    %440 = vmatprep.subr.mxu0 0.0
    %441 = vmatpush1.msra.mxu0 0.0
    %442 = vmatprep.subr.mxu0 0.0
    %443 = vmatpush1.msra.mxu0 0.0
    %444 = vmatprep.subr.mxu0 0.0
    %445 = vmatpush1.msra.mxu0 0.0
    %446 = vmatprep.subr.mxu0 0.0
    %447 = vmatpush1.msra.mxu0 0.0
    %448 = vmatprep.subr.mxu0 0.0
    %449 = vmatpush1.msra.mxu0 0.0
    %450 = vmatprep.subr.mxu0 0.0
    %451 = vmatpush1.msra.mxu0 0.0
    %452 = vmatprep.subr.mxu0 0.0
    %453 = vmatpush1.msra.mxu0 0.0
    %454 = vmatprep.subr.mxu0 0.0
    %455 = vmatpush1.msra.mxu0 0.0
    %456 = vmatprep.subr.mxu0 0.0
    %457 = vmatpush1.msra.mxu0 0.0
    %458 = vmatprep.subr.mxu0 0.0
    %459 = vmatpush1.msra.mxu0 0.0
    %460 = vmatprep.subr.mxu0 0.0
    %461 = vmatpush1.msra.mxu0 0.0
    %462 = vmatprep.subr.mxu0 0.0
    %463 = vmatpush1.msra.mxu0 0.0
    %464 = vmatprep.subr.mxu0 0.0
    %465 = vmatpush1.msra.mxu0 0.0
    %466 = vmatprep.subr.mxu0 0.0
    %467 = vmatpush1.msra.mxu0 0.0
    %468 = vmatprep.subr.mxu0 0.0
    %469 = vmatpush1.msra.mxu0 0.0
    %470 = vmatprep.subr.mxu0 0.0
    %471 = vmatpush1.msra.mxu0 0.0
    %472 = vmatprep.subr.mxu0 0.0
    %473 = vmatpush1.msra.mxu0 0.0
    %474 = vmatprep.subr.mxu0 0.0
    %475 = vmatpush1.msra.mxu0 0.0
    %476 = vmatprep.subr.mxu0 0.0
    %477 = vmatpush1.msra.mxu0 0.0
    %478 = vmatprep.subr.mxu0 0.0
    %479 = vmatpush1.msra.mxu0 0.0
    %480 = vmatprep.subr.mxu0 0.0
    %481 = vmatpush1.msra.mxu0 0.0
    %482 = vmatprep.subr.mxu0 0.0
    %483 = vmatpush1.msra.mxu0 0.0
    %484 = vmatprep.subr.mxu0 0.0
    %485 = vmatpush1.msra.mxu0 0.0
    %486 = vmatprep.subr.mxu0 0.0
    %487 = vmatpush1.msra.mxu0 0.0
    %488 = vmatprep.mubr.f32.mxu0 0.0
    %489 = vmatmul.mubr.f32.gmra.mrb[0].mxu0 %v422
    %v490 = vpop.f32.mrb[0].mxu0
    %v491 = vadd.f32 0.0, %v490
    %v492 = vpop.f32.mrb[0].mxu0
    %493 = vdwg.mxu0
    %v495 = vsel %vm398, %v420, 0
    %497 = vmatprep.subr.mxu0 0.0
    %498 = vmatpush1.msra.mxu0 %v255
    %499 = vmatprep.subr.mxu0 0.0
    %500 = vmatpush1.msra.mxu0 0.0
    %501 = vmatprep.subr.mxu0 0.0
    %502 = vmatpush1.msra.mxu0 0.0
    %503 = vmatprep.subr.mxu0 0.0
    %504 = vmatpush1.msra.mxu0 0.0
    %505 = vmatprep.subr.mxu0 0.0
    %506 = vmatpush1.msra.mxu0 0.0
    %507 = vmatprep.subr.mxu0 0.0
    %508 = vmatpush1.msra.mxu0 0.0
    %509 = vmatprep.subr.mxu0 0.0
    %510 = vmatpush1.msra.mxu0 0.0
    %511 = vmatprep.subr.mxu0 0.0
    %512 = vmatpush1.msra.mxu0 0.0
    %513 = vmatprep.subr.mxu0 0.0
    %514 = vmatpush1.msra.mxu0 0.0
    %515 = vmatprep.subr.mxu0 0.0
    %516 = vmatpush1.msra.mxu0 0.0
    %517 = vmatprep.subr.mxu0 0.0
    %518 = vmatpush1.msra.mxu0 0.0
    %519 = vmatprep.subr.mxu0 0.0
    %520 = vmatpush1.msra.mxu0 0.0
    %521 = vmatprep.subr.mxu0 0.0
    %522 = vmatpush1.msra.mxu0 0.0
    %523 = vmatprep.subr.mxu0 0.0
    %524 = vmatpush1.msra.mxu0 0.0
    %525 = vmatprep.subr.mxu0 0.0
    %526 = vmatpush1.msra.mxu0 0.0
    %527 = vmatprep.subr.mxu0 0.0
    %528 = vmatpush1.msra.mxu0 0.0
    %529 = vmatprep.subr.mxu0 0.0
    %530 = vmatpush1.msra.mxu0 0.0
    %531 = vmatprep.subr.mxu0 0.0
    %532 = vmatpush1.msra.mxu0 0.0
    %533 = vmatprep.subr.mxu0 0.0
    %534 = vmatpush1.msra.mxu0 0.0
    %535 = vmatprep.subr.mxu0 0.0
    %536 = vmatpush1.msra.mxu0 0.0
    %537 = vmatprep.subr.mxu0 0.0
    %538 = vmatpush1.msra.mxu0 0.0
    %539 = vmatprep.subr.mxu0 0.0
    %540 = vmatpush1.msra.mxu0 0.0
    %541 = vmatprep.subr.mxu0 0.0
    %542 = vmatpush1.msra.mxu0 0.0
    %543 = vmatprep.subr.mxu0 0.0
    %544 = vmatpush1.msra.mxu0 0.0
    %545 = vmatprep.subr.mxu0 0.0
    %546 = vmatpush1.msra.mxu0 0.0
    %547 = vmatprep.subr.mxu0 0.0
    %548 = vmatpush1.msra.mxu0 0.0
    %549 = vmatprep.subr.mxu0 0.0
    %550 = vmatpush1.msra.mxu0 0.0
    %551 = vmatprep.subr.mxu0 0.0
    %552 = vmatpush1.msra.mxu0 0.0
    %553 = vmatprep.subr.mxu0 0.0
    %554 = vmatpush1.msra.mxu0 0.0
    %555 = vmatprep.subr.mxu0 0.0
    %556 = vmatpush1.msra.mxu0 0.0
    %557 = vmatprep.subr.mxu0 0.0
    %558 = vmatpush1.msra.mxu0 0.0
    %559 = vmatprep.subr.mxu0 0.0
    %560 = vmatpush1.msra.mxu0 0.0
    %561 = vmatprep.mubr.f32.mxu0 0.0
    %562 = vmatmul.mubr.f32.gmra.mrb[0].mxu0 %v495
    %v563 = vpop.f32.mrb[0].mxu0
    %v564 = vadd.f32 0.0, %v563
    %v565 = vpop.f32.mrb[0].mxu0
    %566 = vdwg.mxu0
    %v567 = vld [vmem:[#allocation7] sm:$0xff]
    %v568 = vld [vmem:[#allocation7 + $0x8] sm:$0xff]
    %v569 = vld [vmem:[#allocation7 + $0x10] sm:$0xff]
    %v570 = vld [vmem:[#allocation7 + $0x18] sm:$0xff]
    %v571 = vld [vmem:[#allocation7 + $0x20] sm:$0xff]
    %v572 = vld [vmem:[#allocation7 + $0x28] sm:$0xff]
    %v573 = vld [vmem:[#allocation7 + $0x30] sm:$0xff]
    %v574 = vld [vmem:[#allocation7 + $0x38] sm:$0xff]
    %v575 = vld [vmem:[#allocation7 + $0x40] sm:$0xff]
    %v576 = vld [vmem:[#allocation7 + $0x48] sm:$0xff]
    %v577 = vld [vmem:[#allocation7 + $0x50] sm:$0xff]
    %v578 = vld [vmem:[#allocation7 + $0x58] sm:$0xff]
    %v579 = vld [vmem:[#allocation7 + $0x60] sm:$0xff]
    %v580 = vld [vmem:[#allocation7 + $0x68] sm:$0xff]
    %v581 = vld [vmem:[#allocation7 + $0x70] sm:$0xff]
    %v582 = vld [vmem:[#allocation7 + $0x78] sm:$0xff]
    %583 = vmatprep.subr.mxu0 0.0
    %584 = vmatpush1.msra.mxu0 %v567
    %585 = vmatprep.subr.mxu0 0.0
    %586 = vmatpush1.msra.mxu0 %v568
    %587 = vmatprep.subr.mxu0 0.0
    %588 = vmatpush1.msra.mxu0 %v569
    %589 = vmatprep.subr.mxu0 0.0
    %590 = vmatpush1.msra.mxu0 %v570
    %591 = vmatprep.subr.mxu0 0.0
    %592 = vmatpush1.msra.mxu0 %v571
    %593 = vmatprep.subr.mxu0 0.0
    %594 = vmatpush1.msra.mxu0 %v572
    %595 = vmatprep.subr.mxu0 0.0
    %596 = vmatpush1.msra.mxu0 %v573
    %597 = vmatprep.subr.mxu0 0.0
    %598 = vmatpush1.msra.mxu0 %v574
    %599 = vmatprep.subr.mxu0 0.0
    %600 = vmatpush1.msra.mxu0 %v575
    %601 = vmatprep.subr.mxu0 0.0
    %602 = vmatpush1.msra.mxu0 %v576
    %603 = vmatprep.subr.mxu0 0.0
    %604 = vmatpush1.msra.mxu0 %v577
    %605 = vmatprep.subr.mxu0 0.0
    %606 = vmatpush1.msra.mxu0 %v578
    %607 = vmatprep.subr.mxu0 0.0
    %608 = vmatpush1.msra.mxu0 %v579
    %609 = vmatprep.subr.mxu0 0.0
    %610 = vmatpush1.msra.mxu0 %v580
    %611 = vmatprep.subr.mxu0 0.0
    %612 = vmatpush1.msra.mxu0 %v581
    %613 = vmatprep.subr.mxu0 0.0
    %614 = vmatpush1.msra.mxu0 %v582
    %615 = vmatprep.subr.mxu0 0.0
    %616 = vmatpush1.msra.mxu0 0.0
    %617 = vmatprep.subr.mxu0 0.0
    %618 = vmatpush1.msra.mxu0 0.0
    %619 = vmatprep.subr.mxu0 0.0
    %620 = vmatpush1.msra.mxu0 0.0
    %621 = vmatprep.subr.mxu0 0.0
    %622 = vmatpush1.msra.mxu0 0.0
    %623 = vmatprep.subr.mxu0 0.0
    %624 = vmatpush1.msra.mxu0 0.0
    %625 = vmatprep.subr.mxu0 0.0
    %626 = vmatpush1.msra.mxu0 0.0
    %627 = vmatprep.subr.mxu0 0.0
    %628 = vmatpush1.msra.mxu0 0.0
    %629 = vmatprep.subr.mxu0 0.0
    %630 = vmatpush1.msra.mxu0 0.0
    %631 = vmatprep.subr.mxu0 0.0
    %632 = vmatpush1.msra.mxu0 0.0
    %633 = vmatprep.subr.mxu0 0.0
    %634 = vmatpush1.msra.mxu0 0.0
    %635 = vmatprep.subr.mxu0 0.0
    %636 = vmatpush1.msra.mxu0 0.0
    %637 = vmatprep.subr.mxu0 0.0
    %638 = vmatpush1.msra.mxu0 0.0
    %639 = vmatprep.subr.mxu0 0.0
    %640 = vmatpush1.msra.mxu0 0.0
    %641 = vmatprep.subr.mxu0 0.0
    %642 = vmatpush1.msra.mxu0 0.0
    %643 = vmatprep.subr.mxu0 0.0
    %644 = vmatpush1.msra.mxu0 0.0
    %645 = vmatprep.subr.mxu0 0.0
    %646 = vmatpush1.msra.mxu0 0.0
    %647 = vmatprep.mubr.f32.mxu0 0.0
    %648 = vmatmul.mubr.f32.gmra.mrb[0].mxu0 %v491
    %v649 = vpop.f32.mrb[0].mxu0
    %v650 = vadd.f32 0.0, %v649
    %v651 = vpop.f32.mrb[0].mxu0
    %652 = vmatprep.mubr.f32.mxu0 0.0
    %653 = vmatmul.mubr.f32.gmra.mrb[0].mxu0 %v564
    %v654 = vpop.f32.mrb[0].mxu0
    %v655 = vadd.f32 0.0, %v654
    %v656 = vpop.f32.mrb[0].mxu0
    %657 = vdwg.mxu0
    %658 = vst [vmem:[#allocation8] sm:$0xff] %v650
    %659 = vst [vmem:[#allocation8 + $0x8] sm:$0xff] %v655
    // Predicated region
    $region26: #{tpu_custom_call.1} parent=1 // pred_check
      _
    $region27: #{tpu_custom_call.1} parent=1 // pred_check_branch
      %661 = sbr.rel (0) target = $region29
    $region28: #{tpu_custom_call.1} parent=1 // pred_region
      %s663 = ssub.s32 256, 256
      %664 = vsyncadd [#allocation4], %s663
      %s665 = sshll.u32 [#allocation8], 4
      %s666 = int_to_ptr.vmem [resolvable:$true] %s665
      %671 = dma.vmem_to_hbm [thread:$0]  %s666, 256, %s3, [#allocation4], 128, 128, 8
    $region29: #{tpu_custom_call.1} parent=1 // pred_fallthru
      _
    // Predicated region
    $region30: #{tpu_custom_call.1} parent=1 // pred_check
      _
    $region31: #{tpu_custom_call.1} parent=1 // pred_check_branch
      %673 = sbr.rel (0) target = $region33
    $region32: #{tpu_custom_call.1} parent=1 // pred_region
      %674 = dma.done [#allocation4], 256
    $region33: #{tpu_custom_call.1} parent=1 // pred_fallthru
      _
    %675 = vsyncpa [#allocation3], 1
    %676 = vsyncpa [#allocation6], 1
    %677 = vsyncpa [#allocation4], 1

</llo_original>
